<compile_context>
chip_gen: v7x
topology: tpu7x:2x2x1
jax: 0.10.0
libtpu: 0.0.40
codegen_flags: <defaults>
</compile_context>

<pallas_src>
import functools
import math

import jax
import jax.numpy as jnp
from jax import lax
from jax.experimental import pallas as pl
from jax.experimental.pallas import tpu as pltpu


# ------------------------------ tiling helpers ------------------------------ #

def _sublane_align(dtype):
    """Sublane alignment for the second-to-last tile dim (8 f32 / 16 bf16 / 32 i8)."""
    return max(8, 32 // jnp.dtype(dtype).itemsize)


def _pick_tile(dim, target, align):
    """Largest multiple of `align` that divides `dim` and is <= target.

    Falls back to the full dim (full-extent blocks are always legal; for very
    large non-divisible dims this may need a manual tile override)."""
    if dim <= target:
        return dim
    t = (target // align) * align
    while t >= align:
        if dim % t == 0:
            return t
        t -= align
    return dim


# Weights at or below this size are kept resident in VMEM (constant index_map,
# no HBM re-streaming).  Conservative so it also holds on v5e (16 MiB default
# scoped VMEM) and v7x (64 MiB physical); raise together with vmem_limit_bytes.
_RESIDENT_WEIGHT_BYTES = 8 * 1024 * 1024


def _compiler_params(dims, vmem_limit_bytes=None):
    if vmem_limit_bytes is None:
        return pltpu.CompilerParams(dimension_semantics=dims)
    return pltpu.CompilerParams(dimension_semantics=dims,
                                vmem_limit_bytes=vmem_limit_bytes)


# ----------------------------- projection kernels -------------------------- #

def _linear_resident_kernel(x_ref, w_ref, b_ref, o_ref):
    """y = x @ w_t + b with the whole weight resident in VMEM (no K loop)."""
    y = jnp.dot(x_ref[...].astype(w_ref.dtype), w_ref[...],
                preferred_element_type=jnp.float32) + b_ref[...]
    o_ref[...] = y.astype(o_ref.dtype)


def _linear_tiled_kernel(x_ref, w_ref, b_ref, o_ref, acc_ref):
    """Large-weight fallback: N-tiled output, K-loop f32 accumulation."""
    ki = pl.program_id(3)

    @pl.when(ki == 0)
    def _init():
        acc_ref[...] = jnp.zeros_like(acc_ref)

    acc_ref[...] += jnp.dot(x_ref[...].astype(w_ref.dtype), w_ref[...],
                            preferred_element_type=jnp.float32)

    @pl.when(ki == pl.num_programs(3) - 1)
    def _finalize():
        o_ref[...] = (acc_ref[...] + b_ref[...]).astype(o_ref.dtype)


def pallas_linear(x, w_t, b2d, *, out_dtype,
                  tm_target=512, tk_target=512, tn_target=512,
                  vmem_limit_bytes=None):
    """x: (B, S, d_in), w_t: (d_in, d_out) pre-transposed, b2d: (1, d_out)."""
    B, S, d_in = x.shape
    d_out = w_t.shape[1]
    tm = _pick_tile(S, tm_target, _sublane_align(w_t.dtype))
    w_bytes = d_in * d_out * jnp.dtype(w_t.dtype).itemsize

    if w_bytes <= _RESIDENT_WEIGHT_BYTES:
        # Resident weight: constant index_map -> fetched once, never re-streamed.
        return pl.pallas_call(
            _linear_resident_kernel,
            out_shape=jax.ShapeDtypeStruct((B, S, d_out), out_dtype),
            grid=(B, S // tm),
            in_specs=[
                pl.BlockSpec((None, tm, d_in), lambda b, si: (b, si, 0)),
                pl.BlockSpec((d_in, d_out), lambda b, si: (0, 0)),
                pl.BlockSpec((1, d_out), lambda b, si: (0, 0)),
            ],
            out_specs=pl.BlockSpec((None, tm, d_out), lambda b, si: (b, si, 0)),
            compiler_params=_compiler_params(("parallel", "parallel"),
                                             vmem_limit_bytes),
        )(x, w_t, b2d)

    # Large d_model fallback (e.g. v7x 64 MiB VMEM): tile N and K, K innermost.
    tk = _pick_tile(d_in, tk_target, 128)
    tn = _pick_tile(d_out, tn_target, 128)
    return pl.pallas_call(
        _linear_tiled_kernel,
        out_shape=jax.ShapeDtypeStruct((B, S, d_out), out_dtype),
        grid=(B, S // tm, d_out // tn, d_in // tk),
        in_specs=[
            pl.BlockSpec((None, tm, tk), lambda b, si, ni, ki: (b, si, ki)),
            pl.BlockSpec((tk, tn), lambda b, si, ni, ki: (ki, ni)),
            pl.BlockSpec((1, tn), lambda b, si, ni, ki: (0, ni)),
        ],
        out_specs=pl.BlockSpec((None, tm, tn), lambda b, si, ni, ki: (b, si, ni)),
        scratch_shapes=[pltpu.VMEM((tm, tn), jnp.float32)],
        compiler_params=_compiler_params(
            ("parallel", "parallel", "parallel", "arbitrary"), vmem_limit_bytes),
    )(x, w_t, b2d)


def _fused_qkv_kernel(x_ref, w_ref, b_ref, q_ref, k_ref, v_ref, *, d_model):
    """Fused QKV projection with the (d_model, 3*d_model) weight resident.

    1/sqrt(d_k) is already folded into the Q columns of the weight/bias."""
    y = jnp.dot(x_ref[...].astype(w_ref.dtype), w_ref[...],
                preferred_element_type=jnp.float32) + b_ref[...]
    # Lane-aligned slices when d_model is a multiple of 128 (production case).
    q_ref[...] = y[:, 0:d_model].astype(q_ref.dtype)
    k_ref[...] = y[:, d_model:2 * d_model].astype(k_ref.dtype)
    v_ref[...] = y[:, 2 * d_model:3 * d_model].astype(v_ref.dtype)


def fused_qkv_projection(x, w_qkv_t, b_qkv, *, out_dtype, tm_target=512,
                         vmem_limit_bytes=None):
    """x: (B, S, d_model), w_qkv_t: (d_model, 3*d_model) -> q, k, v (B, S, d_model)."""
    B, S, d_model = x.shape
    tm = _pick_tile(S, tm_target, _sublane_align(w_qkv_t.dtype))
    out_sds = jax.ShapeDtypeStruct((B, S, d_model), out_dtype)
    out_spec = pl.BlockSpec((None, tm, d_model), lambda b, si: (b, si, 0))
    return pl.pallas_call(
        functools.partial(_fused_qkv_kernel, d_model=d_model),
        out_shape=(out_sds, out_sds, out_sds),
        grid=(B, S // tm),
        in_specs=[
            pl.BlockSpec((None, tm, d_model), lambda b, si: (b, si, 0)),
            pl.BlockSpec((d_model, 3 * d_model), lambda b, si: (0, 0)),
            pl.BlockSpec((1, 3 * d_model), lambda b, si: (0, 0)),
        ],
        out_specs=(out_spec, out_spec, out_spec),
        compiler_params=_compiler_params(("parallel", "parallel"),
                                         vmem_limit_bytes),
    )(x, w_qkv_t, b_qkv)


# ----------------------------- attention kernel ----------------------------- #

def _mha_flash_kernel(q_ref, k_ref, v_ref, bias_ref, o_ref,
                      m_scr, l_scr, acc_scr, *, h, d_k):
    """Flash-style attention over KV tiles; all heads per grid step.

    q_ref/k_ref/v_ref: (tq|tkv, d_model) lane-dense blocks (q already scaled by
    1/sqrt(d_k) via the projection weights); bias_ref: (1 or tq, tkv) additive
    mask bias; o_ref: (tq, d_model) lane-dense output block."""
    ki = pl.program_id(2)

    @pl.when(ki == 0)
    def _init():
        m_scr[...] = jnp.full_like(m_scr, -jnp.inf)
        l_scr[...] = jnp.zeros_like(l_scr)
        acc_scr[...] = jnp.zeros_like(acc_scr)

    q = q_ref[...]                                          # (tq, d_model)
    k = k_ref[...]                                          # (tkv, d_model)
    v = v_ref[...]                                          # (tkv, d_model)
    tq, tkv = q.shape[0], k.shape[0]
    # Hoist the mask-bias broadcast out of the head loop (JAX does not CSE it).
    bias = jnp.broadcast_to(bias_ref[...], (tq, tkv))       # (tq, tkv) f32

    for hh in range(h):                                     # static unroll over heads
        lo = hh * d_k
        q_h = q[:, lo:lo + d_k]
        k_h = k[:, lo:lo + d_k]
        v_h = v[:, lo:lo + d_k]
        # QK^T without an explicit transpose: contract d_k of both operands.
        s = lax.dot_general(q_h, k_h, (((1,), (1,)), ((), ())),
                            preferred_element_type=jnp.float32)  # (tq, tkv)
        s = s + bias
        m_prev = m_scr[hh, :, :]                            # (tq, 1)
        m_new = jnp.maximum(m_prev, jnp.max(s, axis=-1, keepdims=True))
        alpha = jnp.exp(m_prev - m_new)
        p = jnp.exp(s - m_new)
        l_scr[hh, :, :] = alpha * l_scr[hh, :, :] + jnp.sum(p, axis=-1, keepdims=True)
        # p cast to the compute dtype (bf16) -> MXU-native PV matmul, f32 acc.
        acc_scr[hh, :, :] = alpha * acc_scr[hh, :, :] + jnp.dot(
            p.astype(v_h.dtype), v_h, preferred_element_type=jnp.float32)
        m_scr[hh, :, :] = m_new

    # Single finalize region (one scf.if), runs once per q tile.  For
    # d_k % 128 == 0 each store is an unmasked lane-aligned vst.
    @pl.when(ki == pl.num_programs(2) - 1)
    def _finalize():
        for hh in range(h):
            lo = hh * d_k
            inv_l = pl.reciprocal(l_scr[hh, :, :], approx=True)   # EUP slot
            o_ref[:, lo:lo + d_k] = (acc_scr[hh, :, :] * inv_l).astype(o_ref.dtype)


def flash_attention(q, k, v, mask_bias, h, *, out_dtype,
                    tq_target=256, tkv_target=512, vmem_limit_bytes=None):
    """q/k/v: (B, S, d_model), q pre-scaled; mask_bias: (B, 1 or S_q, S_k) f32.

    tq_target: raise to 512 on v6e (128 MiB VMEM); keep 256 on v7x/v5e."""
    B, S_q, d_model = q.shape
    S_k = k.shape[1]
    d_k = d_model // h
    tq = _pick_tile(S_q, tq_target, _sublane_align(q.dtype))
    tkv = _pick_tile(S_k, tkv_target, 128)
    grid = (B, S_q // tq, S_k // tkv)

    bias_rows = mask_bias.shape[1]          # 1 (key padding) or S_q (legacy/causal)
    if bias_rows == 1:
        bias_spec = pl.BlockSpec((None, 1, tkv), lambda b, qi, ki: (b, 0, ki))
    else:
        bias_spec = pl.BlockSpec((None, tq, tkv), lambda b, qi, ki: (b, qi, ki))

    return pl.pallas_call(
        functools.partial(_mha_flash_kernel, h=h, d_k=d_k),
        out_shape=jax.ShapeDtypeStruct((B, S_q, d_model), out_dtype),
        grid=grid,
        in_specs=[
            pl.BlockSpec((None, tq, d_model), lambda b, qi, ki: (b, qi, 0)),
            pl.BlockSpec((None, tkv, d_model), lambda b, qi, ki: (b, ki, 0)),
            pl.BlockSpec((None, tkv, d_model), lambda b, qi, ki: (b, ki, 0)),
            bias_spec,
        ],
        out_specs=pl.BlockSpec((None, tq, d_model), lambda b, qi, ki: (b, qi, 0)),
        scratch_shapes=[pltpu.VMEM((h, tq, 1), jnp.float32),     # running max
                        pltpu.VMEM((h, tq, 1), jnp.float32),     # running sum
                        pltpu.VMEM((h, tq, d_k), jnp.float32)],  # output accumulator
        compiler_params=_compiler_params(("parallel", "parallel", "arbitrary"),
                                         vmem_limit_bytes),
    )(q, k, v, mask_bias)


# ------------------------------ module wrapper ------------------------------ #

def prepare_params(params, compute_dtype=jnp.bfloat16):
    """One-time parameter prep: transpose weights to (in, out), fold 1/sqrt(d_k)
    into the Q projection, concatenate QKV weights, cast weights to the MXU
    compute dtype (bf16 by default; biases stay f32 for the f32 accumulators)."""
    d_model = params["wq"].shape[0]
    h = params["h"]
    d_k = d_model // h
    scale = 1.0 / math.sqrt(d_k)                 # folded into wq/bq (static fold)

    wq_t = (params["wq"].T * scale).astype(compute_dtype)
    wk_t = params["wk"].T.astype(compute_dtype)
    wv_t = params["wv"].T.astype(compute_dtype)
    bq = (params["bq"] * scale).astype(jnp.float32)
    bk = params["bk"].astype(jnp.float32)
    bv = params["bv"].astype(jnp.float32)

    return {
        "h": h,
        "compute_dtype": compute_dtype,
        "wq_t": wq_t, "bq": bq.reshape(1, d_model),
        "wk_t": wk_t, "bk": bk.reshape(1, d_model),
        "wv_t": wv_t, "bv": bv.reshape(1, d_model),
        "w_qkv_t": jnp.concatenate([wq_t, wk_t, wv_t], axis=1),
        "b_qkv": jnp.concatenate([bq, bk, bv]).reshape(1, 3 * d_model),
        "wo_t": params["wo"].T.astype(compute_dtype),
        "bo": params["bo"].reshape(1, d_model).astype(jnp.float32),
    }


def multi_head_attention(prepared, query, key, value, mask=None, *,
                         vmem_limit_bytes=None):
    """Forward pass matching the PyTorch MultiHeadAttention.forward (eval mode)."""
    B, S_q, d_model = query.shape
    S_k = key.shape[1]
    h = prepared["h"]
    cdt = prepared["compute_dtype"]

    if mask is None:
        mask = jnp.ones((B, 1, S_k), dtype=jnp.int32)
    if mask.ndim == 2:
        mask = mask[:, None, :]
    # Additive f32 mask bias (0 keep / -1e9 masked); supports (B, 1, S_k)
    # key-padding masks and (B, S_q, S_k) legacy/causal masks.
    mask_bias = jnp.where(mask == 0, jnp.float32(-1e9), jnp.float32(0.0))

    w_qkv = prepared["w_qkv_t"]
    qkv_bytes = w_qkv.size * jnp.dtype(w_qkv.dtype).itemsize
    if (query is key) and (key is value) and qkv_bytes <= _RESIDENT_WEIGHT_BYTES:
        # Self-attention fast path: one x read, one wide resident QKV matmul.
        q, k, v = fused_qkv_projection(query, w_qkv, prepared["b_qkv"],
                                       out_dtype=cdt,
                                       vmem_limit_bytes=vmem_limit_bytes)
    else:
        q = pallas_linear(query, prepared["wq_t"], prepared["bq"], out_dtype=cdt,
                          vmem_limit_bytes=vmem_limit_bytes)
        k = pallas_linear(key, prepared["wk_t"], prepared["bk"], out_dtype=cdt,
                          vmem_limit_bytes=vmem_limit_bytes)
        v = pallas_linear(value, prepared["wv_t"], prepared["bv"], out_dtype=cdt,
                          vmem_limit_bytes=vmem_limit_bytes)

    x = flash_attention(q, k, v, mask_bias, h, out_dtype=cdt,
                        vmem_limit_bytes=vmem_limit_bytes)   # (B, S_q, d_model)
    # TODO(synk): dropout on attention probabilities skipped (eval-mode identity).
    return pallas_linear(x, prepared["wo_t"], prepared["bo"],
                         out_dtype=jnp.float32, vmem_limit_bytes=vmem_limit_bytes)


# -------------------------------- reference --------------------------------- #

def reference_mha(params, query, key, value, mask):
    h = params["h"]
    B, S, d_model = query.shape
    d_k = d_model // h

    def lin(x, w, b):
        return x @ w.T + b

    def split(x):
        return x.reshape(B, -1, h, d_k).transpose(0, 2, 1, 3)

    q = split(lin(query, params["wq"], params["bq"]))
    k = split(lin(key, params["wk"], params["bk"]))
    v = split(lin(value, params["wv"], params["bv"]))
    scores = q @ (k.transpose(0, 1, 3, 2) / math.sqrt(d_k))
    m = mask[:, None, :, :]
    scores = jnp.where(m == 0, -1e9, scores)
    p = jax.nn.softmax(scores, axis=-1)
    x = p @ v
    x = x.transpose(0, 2, 1, 3).reshape(B, -1, d_model)
    return lin(x, params["wo"], params["bo"])


# ----------------------------------- main ------------------------------------ #

if __name__ == "__main__":
    B, S, d_model, h = 2, 8, 32, 4

    root = jax.random.PRNGKey(0)
    keys = jax.random.split(root, 12)
    bound = 1.0 / math.sqrt(d_model)  # PyTorch nn.Linear default init range

    def u(k_, shape):
        return jax.random.uniform(k_, shape, jnp.float32, -bound, bound)

    params = {
        "h": h,
        "wq": u(keys[0], (d_model, d_model)), "bq": u(keys[1], (d_model,)),
        "wk": u(keys[2], (d_model, d_model)), "bk": u(keys[3], (d_model,)),
        "wv": u(keys[4], (d_model, d_model)), "bv": u(keys[5], (d_model,)),
        "wo": u(keys[6], (d_model, d_model)), "bo": u(keys[7], (d_model,)),
    }
    prepared_bf16 = prepare_params(params, compute_dtype=jnp.bfloat16)  # default
    prepared_f32 = prepare_params(params, compute_dtype=jnp.float32)    # tight check

    query = jax.random.normal(keys[8], (B, S, d_model), jnp.float32)
    key_x = jax.random.normal(keys[9], (B, S, d_model), jnp.float32)
    value = jax.random.normal(keys[10], (B, S, d_model), jnp.float32)
    x_self = jax.random.normal(keys[11], (B, S, d_model), jnp.float32)

    # Key-padding mask (B, 1, S): mask out the last two key positions of batch 1.
    mask = jnp.ones((B, 1, S), dtype=jnp.int32)
    mask = mask.at[1, 0, -2:].set(0)
    # Legacy / causal mask (B, S, S).
    causal = jnp.broadcast_to(jnp.tril(jnp.ones((S, S), jnp.int32))[None], (B, S, S))

    # --- bf16 compute (default): cross-attn, fused self-attn, causal-mask self-attn
    out_cross = jax.block_until_ready(
        multi_head_attention(prepared_bf16, query, key_x, value, mask))
    out_self = jax.block_until_ready(
        multi_head_attention(prepared_bf16, x_self, x_self, x_self, mask))
    out_causal = jax.block_until_ready(
        multi_head_attention(prepared_bf16, x_self, x_self, x_self, causal))

    ref_cross = reference_mha(params, query, key_x, value, mask)
    ref_self = reference_mha(params, x_self, x_self, x_self, mask)
    ref_causal = reference_mha(params, x_self, x_self, x_self, causal)

    assert out_cross.shape == (B, S, d_model)
    assert out_self.shape == (B, S, d_model)
    # bf16 MXU operands + approximate-reciprocal softmax normalization.
    assert jnp.allclose(out_cross, ref_cross, atol=5e-2, rtol=5e-2), "bf16 cross mismatch"
    assert jnp.allclose(out_self, ref_self, atol=5e-2, rtol=5e-2), "bf16 self mismatch"
    assert jnp.allclose(out_causal, ref_causal, atol=5e-2, rtol=5e-2), "bf16 causal mismatch"

    # --- f32 compute: tight numerical check of the same kernel structure.
    out_cross_f32 = jax.block_until_ready(
        multi_head_attention(prepared_f32, query, key_x, value, mask))
    assert jnp.allclose(out_cross_f32, ref_cross, atol=5e-3, rtol=5e-3), "f32 cross mismatch"

    print("KERNEL_OK")
</pallas_src>

<mosaic_0001>
module attributes {stable_mosaic.version = 11 : i64} {
  func.func @_linear_resident_kernel(%arg0: i32, %arg1: i32, %arg2: memref<1x8x32xf32, #tpu.memory_space<vmem>>, %arg3: memref<32x32xbf16, #tpu.memory_space<vmem>>, %arg4: memref<1x32xf32, #tpu.memory_space<vmem>>, %arg5: memref<1x8x32xbf16, #tpu.memory_space<vmem>>) attributes {dimension_semantics = [#tpu.dimension_semantics<parallel>, #tpu.dimension_semantics<parallel>], iteration_bounds = array<i64: 2, 1>, scalar_prefetch = 0 : i64, scratch_operands = 0 : i64, tpu.core_type = #tpu.core_type<tc>, window_params = [{transform_indices = @transform_0, window_bounds = array<i64: 1, 8, 32>}, {pipeline_mode = #tpu.pipeline_mode<synchronous>, transform_indices = @transform_1, window_bounds = array<i64: 32, 32>}, {pipeline_mode = #tpu.pipeline_mode<synchronous>, transform_indices = @transform_2, window_bounds = array<i64: 1, 32>}, {transform_indices = @transform_3, window_bounds = array<i64: 1, 8, 32>}]} {
    %c0 = arith.constant 0 : index
    %c0_0 = arith.constant 0 : index
    %c0_1 = arith.constant 0 : index
    %0 = vector.load %arg2[%c0, %c0_0, %c0_1] : memref<1x8x32xf32, #tpu.memory_space<vmem>>, vector<1x8x32xf32>
    %1 = vector.shape_cast %0 : vector<1x8x32xf32> to vector<8x32xf32>
    %2 = arith.truncf %1 : vector<8x32xf32> to vector<8x32xbf16>
    %c0_2 = arith.constant 0 : index
    %c0_3 = arith.constant 0 : index
    %3 = vector.load %arg3[%c0_2, %c0_3] : memref<32x32xbf16, #tpu.memory_space<vmem>>, vector<32x32xbf16>
    %cst = arith.constant dense<0.000000e+00> : vector<8x32xf32>
    %4 = tpu.matmul %2, %3, %cst {dimension_numbers = #tpu.dot_dimension_numbers<[1], [0], [0], [1], [0, 0, 1, 1], [], []>} : vector<8x32xbf16>, vector<32x32xbf16>, vector<8x32xf32> -> vector<8x32xf32>
    %c0_4 = arith.constant 0 : index
    %c0_5 = arith.constant 0 : index
    %5 = vector.load %arg4[%c0_4, %c0_5] : memref<1x32xf32, #tpu.memory_space<vmem>>, vector<1x32xf32>
    %6 = vector.broadcast %5 : vector<1x32xf32> to vector<8x32xf32>
    %7 = arith.addf %4, %6 : vector<8x32xf32>
    %8 = arith.truncf %7 : vector<8x32xf32> to vector<8x32xbf16>
    %c0_6 = arith.constant 0 : index
    %c0_7 = arith.constant 0 : index
    %c0_8 = arith.constant 0 : index
    %9 = vector.load %arg5[%c0_6, %c0_7, %c0_8] : memref<1x8x32xbf16, #tpu.memory_space<vmem>>, vector<1x8x32xbf16>
    %10 = vector.shape_cast %9 : vector<1x8x32xbf16> to vector<8x32xbf16>
    %11 = vector.shape_cast %8 : vector<8x32xbf16> to vector<1x8x32xbf16>
    tpu.vector_store %arg5[%c0_6, %c0_7, %c0_8], %11 {strides = array<i32>} : memref<1x8x32xbf16, #tpu.memory_space<vmem>>, vector<1x8x32xbf16>,
    return
  }
  func.func @transform_0(%arg0: i32, %arg1: i32) -> (i32, i32, i32) {
    %c0_i32 = arith.constant 0 : i32
    %c0_i32_0 = arith.constant 0 : i32
    return %arg0, %arg1, %c0_i32 : i32, i32, i32
  }
  func.func @transform_1(%arg0: i32, %arg1: i32) -> (i32, i32) {
    %c0_i32 = arith.constant 0 : i32
    %c0_i32_0 = arith.constant 0 : i32
    %c0_i32_1 = arith.constant 0 : i32
    return %c0_i32, %c0_i32_0 : i32, i32
  }
  func.func @transform_2(%arg0: i32, %arg1: i32) -> (i32, i32) {
    %c0_i32 = arith.constant 0 : i32
    %c0_i32_0 = arith.constant 0 : i32
    %c0_i32_1 = arith.constant 0 : i32
    return %c0_i32, %c0_i32_0 : i32, i32
  }
  func.func @transform_3(%arg0: i32, %arg1: i32) -> (i32, i32, i32) {
    %c0_i32 = arith.constant 0 : i32
    %c0_i32_0 = arith.constant 0 : i32
    return %arg0, %arg1, %c0_i32 : i32, i32, i32
  }
}

</mosaic_0001>

<llo_original>
// kernel: tpu_custom_call.1
$region0: #{tpu_custom_call.1}
  #allocation0 [shape = 'u32[]', space=smem, size = 0x4, offset = 0x4, fixed_abs, tag = 'smem constant byte address 0x4 - core index']
  #allocation1 [shape = 'u32[144,128]{1,0:T(1,128)}', space=vmem, size = 0x12000, scoped, tag = 'internal scratch']
  %s0 = inlined_call_operand.hbm [shape: f32[2,8,32], index: 0, kind: input, shape index: {}]
  %s1 = inlined_call_operand.hbm [shape: bf16[32,32], index: 1, kind: input, shape index: {}]
  %s2 = inlined_call_operand.vmem [shape: f32[1,32], index: 2, kind: input, shape index: {}]
  %s3 = inlined_call_operand.hbm [shape: bf16[2,8,32], index: 3, kind: output, shape index: {}]
  %s4 = sld [smem:[#allocation0]]
  $region53: #{tpu_custom_call.1} parent=0
    _
  %s6 = ssub.s32 1, %s4
  %s7 = scalar_select 0, %s6, %s4
  $region1: #{tpu_custom_call.1} parent=0
    #allocation2 [shape = 'u8[8192]{0}', space=vmem, size = 0x2000, scoped, tag = 'input window, operand 0']
    #allocation3 [shape = 's32[2]{0}', space=sflag, size = 0x8, scoped, tag = 'scoped memory for tpu_custom_call.1']
    #allocation4 [shape = 's32[2]{0}', space=sflag, size = 0x8, scoped, tag = 'scoped memory for tpu_custom_call.1']
    #allocation5 [shape = 'u8[8192]{0}', space=vmem, size = 0x2000, scoped, tag = 'input window, operand 1, single buffered']
    #allocation6 [shape = 's32[1]{0}', space=sflag, size = 0x4, scoped, tag = 'scoped memory for tpu_custom_call.1']
    #allocation7 [shape = 'u8[4096]{0}', space=vmem, size = 0x1000, scoped, tag = 'output window, operand 0']
    %8 = vsyncpa [#allocation3], 0
    %s9 = scalar_lea.sflag [#allocation3], 1
    %10 = vsyncpa %s9, 0
    %11 = vsyncpa [#allocation6], 0
    %12 = vsyncpa [#allocation4], 0
    %s13 = scalar_lea.sflag [#allocation4], 1
    %14 = vsyncpa %s13, 0
    loop: start=0, step=1, limit=4
    $region2: #{tpu_custom_call.1} parent=1 // loop_pre_header
      _
    $region3: #{tpu_custom_call.1} parent=1 // loop_header
      %s16 = sphi 0, %s20
      %p17 = scmp.ge.s32.totalorder %s16, 4
      %s23 = sphi 0, %s35
      %s24 = sphi 0, %s31
      %s25 = sphi 0, %s23
      %s26 = sphi 0, %s24
      %s27 = sphi 0, %s25
      %s28 = sphi 0, %s26
      %s40 = sphi 0, %s42
      %s43 = sphi 0, %s40
      %s44 = sphi 0, %s43
      %s60 = sphi 0, %s44
      %s64 = sphi 0, %s64
      %s66 = sphi 0, %s64
      %s67 = sphi 0, %s66
      %s81 = sphi 0, %s67
      %s85 = sphi 0, %s85
      %s87 = sphi 0, %s85
      %s88 = sphi 0, %s87
      %s102 = sphi 0, %s88
      %s110 = sphi 0, %s112
      %s113 = sphi 0, %s110
      %s114 = sphi 0, %s113
      %s130 = sphi 0, %s114
    $region4: #{tpu_custom_call.1} parent=1 // loop_header_branch
      %19 = sbr.rel (%p17) target = $region8
    $region5: #{tpu_custom_call.1} parent=1 // loop_body
      %s21 = ssub.s32 %s16, 1
      %s22 = ssub.s32 %s16, 2
      %s29 = sadd.s32 1, %s24
      %p30 = scmp.ge.s32.totalorder %s29, 1
      %s31 = scalar_select %p30, 0, %s29
      %s32 = sadd.s32 1, %s23
      %s33 = scalar_select %p30, %s32, %s23
      %p34 = scmp.ge.s32.totalorder %s33, 2
      %s35 = scalar_select %p34, 0, %s33
      %s36 = ssub.s32 %s23, %s35
      %s37 = ssub.s32 %s24, %s31
      %s38 = sor.u32 %s36, %s37
      %p39 = scmp.eq.s32.totalorder %s38, 0
      %s41 = sadd.s32 %s40, 1
      %s42 = scalar_select %p39, %s40, %s41
      %p45 = pneg %p39
      %p46 = scmp.eq.s32.totalorder %s16, 1
      %p47 = por %p45, %p46
      %p48 = scmp.ne.s32.totalorder %s40, %s43
      %p49 = scmp.eq.s32.totalorder %s16, 0
      %p50 = por %p48, %p49
      %p51 = scmp.ne.s32.totalorder %s40, %s43
      %p52 = scmp.eq.s32.totalorder %s21, 1
      %p53 = por %p51, %p52
      %p54 = scmp.ne.s32.totalorder %s43, %s44
      %p55 = scmp.eq.s32.totalorder %s21, 0
      %p56 = por %p54, %p55
      %p57 = scmp.ne.s32.totalorder %s43, %s44
      %p58 = scmp.eq.s32.totalorder %s22, 1
      %p59 = por %p57, %p58
      %p61 = scmp.ne.s32.totalorder %s44, %s60
      %p62 = scmp.eq.s32.totalorder %s22, 0
      %p63 = por %p61, %p62
      %s65 = sadd.s32 %s64, 1
      %p68 = scmp.eq.s32.totalorder %s16, 1
      %p69 = scmp.ne.s32.totalorder %s64, %s66
      %p70 = scmp.eq.s32.totalorder %s16, 0
      %p71 = por %p69, %p70
      %p72 = scmp.ne.s32.totalorder %s64, %s66
      %p73 = scmp.eq.s32.totalorder %s21, 1
      %p74 = por %p72, %p73
      %p75 = scmp.ne.s32.totalorder %s66, %s67
      %p76 = scmp.eq.s32.totalorder %s21, 0
      %p77 = por %p75, %p76
      %p78 = scmp.ne.s32.totalorder %s66, %s67
      %p79 = scmp.eq.s32.totalorder %s22, 1
      %p80 = por %p78, %p79
      %p82 = scmp.ne.s32.totalorder %s67, %s81
      %p83 = scmp.eq.s32.totalorder %s22, 0
      %p84 = por %p82, %p83
      %s86 = sadd.s32 %s85, 1
      %p89 = scmp.eq.s32.totalorder %s16, 1
      %p90 = scmp.ne.s32.totalorder %s85, %s87
      %p91 = scmp.eq.s32.totalorder %s16, 0
      %p92 = por %p90, %p91
      %p93 = scmp.ne.s32.totalorder %s85, %s87
      %p94 = scmp.eq.s32.totalorder %s21, 1
      %p95 = por %p93, %p94
      %p96 = scmp.ne.s32.totalorder %s87, %s88
      %p97 = scmp.eq.s32.totalorder %s21, 0
      %p98 = por %p96, %p97
      %p99 = scmp.ne.s32.totalorder %s87, %s88
      %p100 = scmp.eq.s32.totalorder %s22, 1
      %p101 = por %p99, %p100
      %p103 = scmp.ne.s32.totalorder %s88, %s102
      %p104 = scmp.eq.s32.totalorder %s22, 0
      %p105 = por %p103, %p104
      %s106 = ssub.s32 %s23, %s35
      %s107 = ssub.s32 %s24, %s31
      %s108 = sor.u32 %s106, %s107
      %p109 = scmp.eq.s32.totalorder %s108, 0
      %s111 = sadd.s32 %s110, 1
      %s112 = scalar_select %p109, %s110, %s111
      %p115 = pneg %p109
      %p116 = scmp.eq.s32.totalorder %s16, 1
      %p117 = por %p115, %p116
      %p118 = scmp.ne.s32.totalorder %s110, %s113
      %p119 = scmp.eq.s32.totalorder %s16, 0
      %p120 = por %p118, %p119
      %p121 = scmp.ne.s32.totalorder %s110, %s113
      %p122 = scmp.eq.s32.totalorder %s21, 1
      %p123 = por %p121, %p122
      %p124 = scmp.ne.s32.totalorder %s113, %s114
      %p125 = scmp.eq.s32.totalorder %s21, 0
      %p126 = por %p124, %p125
      %p127 = scmp.ne.s32.totalorder %s113, %s114
      %p128 = scmp.eq.s32.totalorder %s22, 1
      %p129 = por %p127, %p128
      %p131 = scmp.ne.s32.totalorder %s114, %s130
      %p132 = scmp.eq.s32.totalorder %s22, 0
      %p133 = por %p131, %p132
      %p134 = scmp.le.s32.totalorder 1, %s16
      %p135 = scmp.lt.s32.totalorder %s16, 3
      %p136 = pnand %p134, %p135
      %p137 = pneg %p136
      // Predicated region
      $region9: #{tpu_custom_call.1} parent=5 // pred_check
        _
      $region10: #{tpu_custom_call.1} parent=5 // pred_check_branch
        %139 = sbr.rel (%p136) target = $region12
      $region11: #{tpu_custom_call.1} parent=5 // pred_region
        %s140 = ssub.s32 %s16, 1
        // Predicated region
        $region13: #{tpu_custom_call.1} parent=11 // pred_check
          %p141 = pneg %p77
        $region14: #{tpu_custom_call.1} parent=11 // pred_check_branch
          %143 = sbr.rel (%p141) target = $region16
        $region15: #{tpu_custom_call.1} parent=11 // pred_region
          %s145 = ssub.s32 256, 256
          %146 = vsyncadd [#allocation6], %s145
          %s147 = sshll.u32 [#allocation5], 4
          %s148 = int_to_ptr.vmem [resolvable:$true] %s147
          %153 = dma.hbm_to_vmem [thread:$0]  %s1, 256, %s148, [#allocation6], 64, 64, 4
        $region16: #{tpu_custom_call.1} parent=11 // pred_fallthru
          _
        // Predicated region
        $region17: #{tpu_custom_call.1} parent=11 // pred_check
          %p154 = pneg %p98
        $region18: #{tpu_custom_call.1} parent=11 // pred_check_branch
          %156 = sbr.rel (%p154) target = $region20
        $region19: #{tpu_custom_call.1} parent=11 // pred_region
          _
        $region20: #{tpu_custom_call.1} parent=11 // pred_fallthru
          _
      $region12: #{tpu_custom_call.1} parent=5 // pred_fallthru
        _
      %p157 = scmp.lt.s32.totalorder %s16, 2
      // Predicated region
      $region21: #{tpu_custom_call.1} parent=5 // pred_check
        %p158 = pneg %p157
      $region22: #{tpu_custom_call.1} parent=5 // pred_check_branch
        %160 = sbr.rel (%p158) target = $region24
      $region23: #{tpu_custom_call.1} parent=5 // pred_region
        // Predicated region
        $region25: #{tpu_custom_call.1} parent=23 // pred_check
          %p161 = pneg %p50
        $region26: #{tpu_custom_call.1} parent=23 // pred_check_branch
          %163 = sbr.rel (%p161) target = $region28
        $region27: #{tpu_custom_call.1} parent=23 // pred_region
          %s164 = sand.u32 %s40, 1
          %s165 = scalar_lea.sflag [#allocation3], %s164
          %s166 = sand.u32 %s40, 1
          %s167 = smul.addr %s166, 8
          %s168 = scalar_lea.vmem [#allocation2], %s167
          %s170 = ssub.s32 128, 128
          %171 = vsyncadd %s165, %s170
          %s172 = sadd.s32 %s24, %s23
          %s173 = smul.addr %s172, 128
          %s174 = scalar_lea.hbm %s0, %s173
          %s176 = sshll.u32 %s168, 4
          %s177 = int_to_ptr.vmem [resolvable:$true] %s176
          %179 = dma.hbm_to_vmem [thread:$0]  %s174, 128, %s177, %s165
        $region28: #{tpu_custom_call.1} parent=23 // pred_fallthru
          _
      $region24: #{tpu_custom_call.1} parent=5 // pred_fallthru
        _
      %p180 = scmp.le.s32.totalorder 1, %s16
      %p181 = scmp.lt.s32.totalorder %s16, 3
      %p182 = pnand %p180, %p181
      %p183 = pneg %p182
      // Predicated region
      $region29: #{tpu_custom_call.1} parent=5 // pred_check
        _
      $region30: #{tpu_custom_call.1} parent=5 // pred_check_branch
        %185 = sbr.rel (%p182) target = $region32
      $region31: #{tpu_custom_call.1} parent=5 // pred_region
        %s186 = ssub.s32 %s16, 1
        %s187 = sand.u32 %s43, 1
        %s188 = scalar_lea.sflag [#allocation3], %s187
        %s189 = sand.u32 %s43, 1
        %s190 = smul.addr %s189, 8
        %s191 = scalar_lea.vmem [#allocation2], %s190
        // Predicated region
        $region33: #{tpu_custom_call.1} parent=31 // pred_check
          %p192 = pneg %p56
        $region34: #{tpu_custom_call.1} parent=31 // pred_check_branch
          %194 = sbr.rel (%p192) target = $region36
        $region35: #{tpu_custom_call.1} parent=31 // pred_region
          %195 = dma.done %s188, 128
        $region36: #{tpu_custom_call.1} parent=31 // pred_fallthru
          _
        // Predicated region
        $region37: #{tpu_custom_call.1} parent=31 // pred_check
          %p196 = pneg %p77
        $region38: #{tpu_custom_call.1} parent=31 // pred_check_branch
          %198 = sbr.rel (%p196) target = $region40
        $region39: #{tpu_custom_call.1} parent=31 // pred_region
          %199 = dma.done [#allocation6], 256
        $region40: #{tpu_custom_call.1} parent=31 // pred_fallthru
          _
        %s200 = sand.u32 %s43, 1
        %s201 = scalar_lea.sflag [#allocation3], %s200
        %s202 = sand.u32 %s43, 1
        %s203 = smul.addr %s202, 8
        %s204 = scalar_lea.vmem [#allocation2], %s203
        %p205 = pneg %p56
        %p206 = pneg %p53
        %p207 = pneg %p77
        %p208 = pneg %p74
        %p209 = pneg %p98
        %p210 = pneg %p95
        %p211 = pneg %p126
        %p212 = pneg %p123
        %s213 = sand.u32 %s113, 1
        %s214 = scalar_lea.sflag [#allocation4], %s213
        %s215 = sand.u32 %s113, 1
        %s216 = smul.addr %s215, 4
        %s217 = scalar_lea.vmem [#allocation7], %s216
        %v219 = vld [vmem:[%s191] sm:$0xff]
        %v220 = vpack.c.bf16 %v219, %v219
        %v221 = vld [vmem:[#allocation5] sm:$0xf]
        %v222 = vld [vmem:[#allocation5 + $0x4] sm:$0xf]
        %v223 = vld [vmem:[#allocation5 + $0x8] sm:$0xf]
        %v224 = vld [vmem:[#allocation5 + $0xc] sm:$0xf]
        %v225 = vld [vmem:[%s2] sm:$0x1]
        %v227 = vlaneseq
        %v228 = vshrl.u32 %v227, 7
        %v229 = vsub.s32 0, %v228
        %v230 = vrot.slane %v225, %v229
        %v236 = vunpack.c.l.b16 %v221
        %v237 = vunpack.c.l.b16 %v222
        %v238 = vunpack.c.l.b16 %v223
        %v239 = vunpack.c.l.b16 %v224
        %v240 = vpack.c.b16 %v237, %v236
        %v241 = vpack.c.b16 %v239, %v238
        %vm244 = vcmask 261120
        %v246 = vsel %vm244, %v220, 0
        %248 = vmatprep.subr.bf16.mxu0 0
        %249 = vmatpush1.bf16.msra.mxu0 %v240
        %250 = vmatprep.subr.bf16.mxu0 0
        %251 = vmatpush1.bf16.msra.mxu0 %v241
        %252 = vmatprep.subr.bf16.mxu0 0
        %253 = vmatpush1.bf16.msra.mxu0 0
        %254 = vmatprep.subr.bf16.mxu0 0
        %255 = vmatpush1.bf16.msra.mxu0 0
        %256 = vmatprep.subr.bf16.mxu0 0
        %257 = vmatpush1.bf16.msra.mxu0 0
        %258 = vmatprep.subr.bf16.mxu0 0
        %259 = vmatpush1.bf16.msra.mxu0 0
        %260 = vmatprep.subr.bf16.mxu0 0
        %261 = vmatpush1.bf16.msra.mxu0 0
        %262 = vmatprep.subr.bf16.mxu0 0
        %263 = vmatpush1.bf16.msra.mxu0 0
        %264 = vmatprep.subr.bf16.mxu0 0
        %265 = vmatpush1.bf16.msra.mxu0 0
        %266 = vmatprep.subr.bf16.mxu0 0
        %267 = vmatpush1.bf16.msra.mxu0 0
        %268 = vmatprep.subr.bf16.mxu0 0
        %269 = vmatpush1.bf16.msra.mxu0 0
        %270 = vmatprep.subr.bf16.mxu0 0
        %271 = vmatpush1.bf16.msra.mxu0 0
        %272 = vmatprep.subr.bf16.mxu0 0
        %273 = vmatpush1.bf16.msra.mxu0 0
        %274 = vmatprep.subr.bf16.mxu0 0
        %275 = vmatpush1.bf16.msra.mxu0 0
        %276 = vmatprep.subr.bf16.mxu0 0
        %277 = vmatpush1.bf16.msra.mxu0 0
        %278 = vmatprep.subr.bf16.mxu0 0
        %279 = vmatpush1.bf16.msra.mxu0 0
        %280 = vmatprep.mubr.bf16.mxu0 0
        %281 = vmatmul.mubr.bf16.gmra.mrb[0].mxu0 %v246
        %v282 = vpop.f32.mrb[0].mxu0
        %v283 = vadd.f32 %v230, %v282
        %v284 = vpop.f32.mrb[0].mxu0
        %v285 = vpop.f32.mrb[0].mxu0
        %v286 = vpop.f32.mrb[0].mxu0
        %287 = vdwg.mxu0
        %v288 = vpack.c.bf16 %v283, %v283
        %vm289 = vcmask 257024
        %290 = vst.msk [vmem:[%s217] sm:$0xf] %vm289, %v288
        %s291 = sand.u32 %s113, 1
        %s292 = scalar_lea.sflag [#allocation4], %s291
        %s293 = sand.u32 %s113, 1
        %s294 = smul.addr %s293, 4
        %s295 = scalar_lea.vmem [#allocation7], %s294
        // Predicated region
        $region41: #{tpu_custom_call.1} parent=31 // pred_check
          %p296 = pneg %p123
        $region42: #{tpu_custom_call.1} parent=31 // pred_check_branch
          %298 = sbr.rel (%p296) target = $region44
        $region43: #{tpu_custom_call.1} parent=31 // pred_region
          %s300 = ssub.s32 64, 64
          %301 = vsyncadd %s292, %s300
          %s302 = sadd.s32 %s26, %s25
          %s303 = smul.addr %s302, 64
          %s304 = scalar_lea.hbm %s3, %s303
          %s306 = sshll.u32 %s295, 4
          %s307 = int_to_ptr.vmem [resolvable:$true] %s306
          %309 = dma.vmem_to_hbm [thread:$0]  %s307, 64, %s304, %s292
        $region44: #{tpu_custom_call.1} parent=31 // pred_fallthru
          _
      $region32: #{tpu_custom_call.1} parent=5 // pred_fallthru
        _
      %p310 = scmp.le.s32.totalorder 2, %s16
      // Predicated region
      $region45: #{tpu_custom_call.1} parent=5 // pred_check
        %p311 = pneg %p310
      $region46: #{tpu_custom_call.1} parent=5 // pred_check_branch
        %313 = sbr.rel (%p311) target = $region48
      $region47: #{tpu_custom_call.1} parent=5 // pred_region
        %s314 = ssub.s32 %s16, 2
        // Predicated region
        $region49: #{tpu_custom_call.1} parent=47 // pred_check
          %p315 = pneg %p129
        $region50: #{tpu_custom_call.1} parent=47 // pred_check_branch
          %317 = sbr.rel (%p315) target = $region52
        $region51: #{tpu_custom_call.1} parent=47 // pred_region
          %s318 = sand.u32 %s114, 1
          %s319 = scalar_lea.sflag [#allocation4], %s318
          %s320 = sand.u32 %s114, 1
          %s321 = smul.addr %s320, 4
          %s322 = scalar_lea.vmem [#allocation7], %s321
          %323 = dma.done %s319, 64
        $region52: #{tpu_custom_call.1} parent=47 // pred_fallthru
          _
      $region48: #{tpu_custom_call.1} parent=5 // pred_fallthru
        _
    $region6: #{tpu_custom_call.1} parent=1 // loop_footer
      %s20 = sadd.s32 1, %s16
    $region7: #{tpu_custom_call.1} parent=1 // loop_footer_branch
      %15 = sbr.rel target = $region3
    $region8: #{tpu_custom_call.1} parent=1 // loop_exit
      _
    %324 = vsyncpa [#allocation3], 1
    %s325 = scalar_lea.sflag [#allocation3], 1
    %326 = vsyncpa %s325, 1
    %327 = vsyncpa [#allocation6], 1
    %328 = vsyncpa [#allocation4], 1
    %s329 = scalar_lea.sflag [#allocation4], 1
    %330 = vsyncpa %s329, 1

</llo_original>
